<compile_context>
chip_gen: v5e
topology: v5e:2x2
jax: 0.10.0
libtpu: 0.0.40
codegen_flags: <defaults>
</compile_context>

<pallas_src>
import jax
import jax.numpy as jnp
from jax.experimental import pallas as pl
from jax.experimental.pallas import tpu as pltpu


def _round_up(n, m):
    return ((n + m - 1) // m) * m


def _mlp_kernel(x_ref, w1_ref, b1_ref, w2_ref, b2_ref, w3_ref, b3_ref, o_ref):
    # In-kernel bf16 cast of the x tile (wrapper feeds f32 straight from HBM).
    x = x_ref[...].astype(jnp.bfloat16)

    # fc1 + ReLU: bf16 MXU matmul, f32 accumulate, f32 epilogue.
    h1 = jnp.dot(x, w1_ref[...], preferred_element_type=jnp.float32)
    h1 = jnp.maximum(h1 + b1_ref[...], 0.0)

    # fc2 + ReLU: cast activations back to bf16 so both MXU operands are bf16.
    h2 = jnp.dot(h1.astype(jnp.bfloat16), w2_ref[...],
                 preferred_element_type=jnp.float32)
    h2 = jnp.maximum(h2 + b2_ref[...], 0.0)

    # fc3: N=1 matmul is degenerate on the MXU -> VPU multiply + XLU lane reduce.
    # w3_ref is the fc3 weight stored as a (1, hidden) f32 row.
    logits_col = jnp.sum(h2 * w3_ref[...], axis=-1, keepdims=True)      # (bt, 1)

    # Densify BEFORE the epilogue: (bt, 1) -> (1, bt), then bias + sigmoid on dense vregs.
    logits_row = jnp.transpose(logits_col) + b3_ref[...]                # (1, bt)
    sig = pl.reciprocal(1.0 + jnp.exp(-logits_row), approx=True)        # (1, bt) f32

    bt = logits_row.shape[-1]
    o_ref[...] = sig.reshape(1, 1, bt).astype(o_ref.dtype)


def orbit_proximity_net(x, w1, b1, w2, b2, w3, b3, *, batch_tile=2048):
    """3-layer MLP forward pass in one Pallas kernel.

    x:  (B, input_dim) float32
    w1: (input_dim, hidden), b1: (hidden,) or (1, hidden)
    w2: (hidden, hidden),    b2: (hidden,) or (1, hidden)
    w3: (hidden, 1),         b3: (1,) or (1, 1)
    returns: (B, 1) float32
    """
    B, input_dim = x.shape
    hidden = w1.shape[1]

    # Tile sizing: multiple of 128 (lane-dense output stores), default 2048.
    bt = max(128, (int(batch_tile) // 128) * 128)
    B_al = _round_up(B, 128)
    if B_al <= bt:
        if B_al >= 1024:
            # Keep >= 2 grid steps so the parallel axis can use both v7x TensorCores.
            bt = _round_up(B_al // 2, 128)
        else:
            bt = B_al
    num_tiles = pl.cdiv(B, bt)

    # Tiny constant operands: bf16 MXU feeds for w1/w2, f32 for biases / fc3 row.
    xf = x.astype(jnp.float32)                      # no pad, no bf16 round-trip in HBM
    w1b = w1.astype(jnp.bfloat16)
    w2b = w2.astype(jnp.bfloat16)
    b1f = jnp.reshape(b1, (1, hidden)).astype(jnp.float32)
    b2f = jnp.reshape(b2, (1, hidden)).astype(jnp.float32)
    w3_row = jnp.reshape(w3, (1, hidden)).astype(jnp.float32)
    b3f = jnp.reshape(b3, (1, 1)).astype(jnp.float32)

    def full(arr):
        nd = arr.ndim
        return pl.BlockSpec(arr.shape, lambda i, _nd=nd: (0,) * _nd)

    out = pl.pallas_call(
        _mlp_kernel,
        out_shape=jax.ShapeDtypeStruct((num_tiles, 1, bt), jnp.float32),
        grid_spec=pltpu.PrefetchScalarGridSpec(
            num_scalar_prefetch=0,
            grid=(num_tiles,),
            in_specs=[
                pl.BlockSpec((bt, input_dim), lambda i: (i, 0)),   # x tile (cdiv edge ok)
                full(w1b), full(b1f), full(w2b), full(b2f), full(w3_row), full(b3f),
            ],
            out_specs=pl.BlockSpec((1, 1, bt), lambda i: (i, 0, 0)),
        ),
        compiler_params=pltpu.CompilerParams(
            dimension_semantics=("parallel",),
        ),
    )(xf, w1b, b1f, w2b, b2f, w3_row, b3f)

    # (num_tiles, 1, bt) lane-dense -> (num_tiles*bt, 1) -> drop tail-tile garbage rows.
    return out.reshape(num_tiles * bt, 1)[:B]


def init_params(key, input_dim, hidden_dim):
    """Deterministic init mimicking PyTorch nn.Linear default (uniform +-1/sqrt(fan_in))."""
    ks = jax.random.split(key, 6)

    def linear(kw, kb, fan_in, fan_out):
        bound = 1.0 / jnp.sqrt(jnp.float32(fan_in))
        w = jax.random.uniform(kw, (fan_in, fan_out), jnp.float32, -bound, bound)
        b = jax.random.uniform(kb, (1, fan_out), jnp.float32, -bound, bound)
        return w, b

    w1, b1 = linear(ks[0], ks[1], input_dim, hidden_dim)
    w2, b2 = linear(ks[2], ks[3], hidden_dim, hidden_dim)
    w3, b3 = linear(ks[4], ks[5], hidden_dim, 1)
    return w1, b1, w2, b2, w3, b3


def reference_forward_bf16(x, w1, b1, w2, b2, w3, b3):
    """Pure-JAX reference with the same bf16/f32 mix as the kernel."""
    h1 = jnp.dot(x.astype(jnp.bfloat16), w1.astype(jnp.bfloat16),
                 preferred_element_type=jnp.float32)
    h1 = jnp.maximum(h1 + b1, 0.0)
    h2 = jnp.dot(h1.astype(jnp.bfloat16), w2.astype(jnp.bfloat16),
                 preferred_element_type=jnp.float32)
    h2 = jnp.maximum(h2 + b2, 0.0)
    logits = jnp.sum(h2 * jnp.reshape(w3, (1, -1)), axis=-1, keepdims=True) + b3
    return jax.nn.sigmoid(logits)


def reference_forward_f32(x, w1, b1, w2, b2, w3, b3):
    h1 = jnp.maximum(x @ w1 + b1, 0.0)
    h2 = jnp.maximum(h1 @ w2 + b2, 0.0)
    return jax.nn.sigmoid(h2 @ w3 + b3)


if __name__ == "__main__":
    key = jax.random.PRNGKey(0)
    k_x, k_p = jax.random.split(key)

    batch = 200        # deliberately ragged: exercises cdiv edge tile + [:B] slicing
    input_dim = 16     # synthetic X_train feature count
    hidden_dim = 64    # as in the PyTorch script

    x = jax.random.normal(k_x, (batch, input_dim), dtype=jnp.float32)
    params = init_params(k_p, input_dim, hidden_dim)

    # Small tile -> 2-step grid with a ragged tail tile.
    out_small = orbit_proximity_net(x, *params, batch_tile=128)
    # Default (large) tile -> single clamped tile.
    out_default = orbit_proximity_net(x, *params)
    out_small, out_default = jax.block_until_ready((out_small, out_default))
    assert out_small.shape == (batch, 1)
    assert out_default.shape == (batch, 1)

    ref_matched = reference_forward_bf16(x, *params)
    err_small = float(jnp.max(jnp.abs(out_small - ref_matched)))
    err_default = float(jnp.max(jnp.abs(out_default - ref_matched)))
    assert err_small < 3e-3, err_small          # approx-reciprocal sigmoid tolerance
    assert err_default < 3e-3, err_default

    ref_f32 = reference_forward_f32(x, *params)  # loose sanity check vs full-f32 math
    assert jnp.allclose(out_small, ref_f32, atol=5e-2), (
        float(jnp.max(jnp.abs(out_small - ref_f32))))

    print("KERNEL_OK")
</pallas_src>

<mosaic_0001>
module attributes {stable_mosaic.version = 11 : i64} {
  func.func @_mlp_kernel(%arg0: i32, %arg1: memref<128x16xf32, #tpu.memory_space<vmem>>, %arg2: memref<16x64xbf16, #tpu.memory_space<vmem>>, %arg3: memref<1x64xf32, #tpu.memory_space<vmem>>, %arg4: memref<64x64xbf16, #tpu.memory_space<vmem>>, %arg5: memref<1x64xf32, #tpu.memory_space<vmem>>, %arg6: memref<1x64xf32, #tpu.memory_space<vmem>>, %arg7: memref<1x1xf32, #tpu.memory_space<vmem>>, %arg8: memref<1x1x128xf32, #tpu.memory_space<vmem>>) attributes {dimension_semantics = [#tpu.dimension_semantics<parallel>], iteration_bounds = array<i64: 2>, scalar_prefetch = 0 : i64, scratch_operands = 0 : i64, tpu.core_type = #tpu.core_type<tc>, window_params = [{transform_indices = @transform_0, window_bounds = array<i64: 128, 16>}, {pipeline_mode = #tpu.pipeline_mode<synchronous>, transform_indices = @transform_1, window_bounds = array<i64: 16, 64>}, {pipeline_mode = #tpu.pipeline_mode<synchronous>, transform_indices = @transform_2, window_bounds = array<i64: 1, 64>}, {pipeline_mode = #tpu.pipeline_mode<synchronous>, transform_indices = @transform_3, window_bounds = array<i64: 64, 64>}, {pipeline_mode = #tpu.pipeline_mode<synchronous>, transform_indices = @transform_4, window_bounds = array<i64: 1, 64>}, {pipeline_mode = #tpu.pipeline_mode<synchronous>, transform_indices = @transform_5, window_bounds = array<i64: 1, 64>}, {pipeline_mode = #tpu.pipeline_mode<synchronous>, transform_indices = @transform_6, window_bounds = array<i64: 1, 1>}, {transform_indices = @transform_7, window_bounds = array<i64: 1, 1, 128>}]} {
    %c0 = arith.constant 0 : index
    %c0_0 = arith.constant 0 : index
    %0 = vector.load %arg1[%c0, %c0_0] : memref<128x16xf32, #tpu.memory_space<vmem>>, vector<128x16xf32>
    %1 = arith.truncf %0 : vector<128x16xf32> to vector<128x16xbf16>
    %c0_1 = arith.constant 0 : index
    %c0_2 = arith.constant 0 : index
    %2 = vector.load %arg2[%c0_1, %c0_2] : memref<16x64xbf16, #tpu.memory_space<vmem>>, vector<16x64xbf16>
    %cst = arith.constant dense<0.000000e+00> : vector<128x64xf32>
    %3 = tpu.matmul %1, %2, %cst {dimension_numbers = #tpu.dot_dimension_numbers<[1], [0], [0], [1], [0, 0, 1, 1], [], []>} : vector<128x16xbf16>, vector<16x64xbf16>, vector<128x64xf32> -> vector<128x64xf32>
    %c0_3 = arith.constant 0 : index
    %c0_4 = arith.constant 0 : index
    %4 = vector.load %arg3[%c0_3, %c0_4] : memref<1x64xf32, #tpu.memory_space<vmem>>, vector<1x64xf32>
    %5 = vector.broadcast %4 : vector<1x64xf32> to vector<128x64xf32>
    %6 = arith.addf %3, %5 : vector<128x64xf32>
    %cst_5 = arith.constant 0.000000e+00 : f32
    %7 = vector.broadcast %cst_5 : f32 to vector<128x64xf32>
    %8 = arith.maximumf %6, %7 : vector<128x64xf32>
    %9 = arith.truncf %8 : vector<128x64xf32> to vector<128x64xbf16>
    %c0_6 = arith.constant 0 : index
    %c0_7 = arith.constant 0 : index
    %10 = vector.load %arg4[%c0_6, %c0_7] : memref<64x64xbf16, #tpu.memory_space<vmem>>, vector<64x64xbf16>
    %cst_8 = arith.constant dense<0.000000e+00> : vector<128x64xf32>
    %11 = tpu.matmul %9, %10, %cst_8 {dimension_numbers = #tpu.dot_dimension_numbers<[1], [0], [0], [1], [0, 0, 1, 1], [], []>} : vector<128x64xbf16>, vector<64x64xbf16>, vector<128x64xf32> -> vector<128x64xf32>
    %c0_9 = arith.constant 0 : index
    %c0_10 = arith.constant 0 : index
    %12 = vector.load %arg5[%c0_9, %c0_10] : memref<1x64xf32, #tpu.memory_space<vmem>>, vector<1x64xf32>
    %13 = vector.broadcast %12 : vector<1x64xf32> to vector<128x64xf32>
    %14 = arith.addf %11, %13 : vector<128x64xf32>
    %cst_11 = arith.constant 0.000000e+00 : f32
    %15 = vector.broadcast %cst_11 : f32 to vector<128x64xf32>
    %16 = arith.maximumf %14, %15 : vector<128x64xf32>
    %c0_12 = arith.constant 0 : index
    %c0_13 = arith.constant 0 : index
    %17 = vector.load %arg6[%c0_12, %c0_13] : memref<1x64xf32, #tpu.memory_space<vmem>>, vector<1x64xf32>
    %18 = vector.broadcast %17 : vector<1x64xf32> to vector<128x64xf32>
    %19 = arith.mulf %16, %18 : vector<128x64xf32>
    %cst_14 = arith.constant dense<0.000000e+00> : vector<128xf32>
    %20 = vector.multi_reduction <add>, %19, %cst_14 [1] : vector<128x64xf32> to vector<128xf32>
    %21 = vector.shape_cast %20 : vector<128xf32> to vector<128x1xf32>
    %22 = tpu.transpose %21, [1, 0] : vector<128x1xf32> -> vector<1x128xf32>
    %c0_15 = arith.constant 0 : index
    %c0_16 = arith.constant 0 : index
    %23 = vector.load %arg7[%c0_15, %c0_16] : memref<1x1xf32, #tpu.memory_space<vmem>>, vector<1x1xf32>
    %24 = vector.broadcast %23 : vector<1x1xf32> to vector<1x128xf32>
    %25 = arith.addf %22, %24 : vector<1x128xf32>
    %cst_17 = arith.constant 0.000000e+00 : f32
    %26 = vector.broadcast %cst_17 : f32 to vector<1x128xf32>
    %27 = arith.subf %26, %25 : vector<1x128xf32>
    %28 = math.exp %27 : vector<1x128xf32>
    %cst_18 = arith.constant 1.000000e+00 : f32
    %29 = vector.broadcast %cst_18 : f32 to vector<1x128xf32>
    %30 = arith.addf %29, %28 : vector<1x128xf32>
    %31 = tpu.reciprocal %30 {approx = true} : vector<1x128xf32> -> vector<1x128xf32>
    %32 = vector.shape_cast %31 : vector<1x128xf32> to vector<1x1x128xf32>
    %c0_19 = arith.constant 0 : index
    %c0_20 = arith.constant 0 : index
    %c0_21 = arith.constant 0 : index
    %33 = vector.load %arg8[%c0_19, %c0_20, %c0_21] : memref<1x1x128xf32, #tpu.memory_space<vmem>>, vector<1x1x128xf32>
    tpu.vector_store %arg8[%c0_19, %c0_20, %c0_21], %32 {strides = array<i32>} : memref<1x1x128xf32, #tpu.memory_space<vmem>>, vector<1x1x128xf32>,
    return
  }
  func.func @transform_0(%arg0: i32) -> (i32, i32) {
    %c0_i32 = arith.constant 0 : i32
    %c0_i32_0 = arith.constant 0 : i32
    return %arg0, %c0_i32 : i32, i32
  }
  func.func @transform_1(%arg0: i32) -> (i32, i32) {
    %c0_i32 = arith.constant 0 : i32
    %c0_i32_0 = arith.constant 0 : i32
    %c0_i32_1 = arith.constant 0 : i32
    return %c0_i32, %c0_i32_0 : i32, i32
  }
  func.func @transform_2(%arg0: i32) -> (i32, i32) {
    %c0_i32 = arith.constant 0 : i32
    %c0_i32_0 = arith.constant 0 : i32
    %c0_i32_1 = arith.constant 0 : i32
    return %c0_i32, %c0_i32_0 : i32, i32
  }
  func.func @transform_3(%arg0: i32) -> (i32, i32) {
    %c0_i32 = arith.constant 0 : i32
    %c0_i32_0 = arith.constant 0 : i32
    %c0_i32_1 = arith.constant 0 : i32
    return %c0_i32, %c0_i32_0 : i32, i32
  }
  func.func @transform_4(%arg0: i32) -> (i32, i32) {
    %c0_i32 = arith.constant 0 : i32
    %c0_i32_0 = arith.constant 0 : i32
    %c0_i32_1 = arith.constant 0 : i32
    return %c0_i32, %c0_i32_0 : i32, i32
  }
  func.func @transform_5(%arg0: i32) -> (i32, i32) {
    %c0_i32 = arith.constant 0 : i32
    %c0_i32_0 = arith.constant 0 : i32
    %c0_i32_1 = arith.constant 0 : i32
    return %c0_i32, %c0_i32_0 : i32, i32
  }
  func.func @transform_6(%arg0: i32) -> (i32, i32) {
    %c0_i32 = arith.constant 0 : i32
    %c0_i32_0 = arith.constant 0 : i32
    %c0_i32_1 = arith.constant 0 : i32
    return %c0_i32, %c0_i32_0 : i32, i32
  }
  func.func @transform_7(%arg0: i32) -> (i32, i32, i32) {
    %c0_i32 = arith.constant 0 : i32
    %c0_i32_0 = arith.constant 0 : i32
    %c0_i32_1 = arith.constant 0 : i32
    return %arg0, %c0_i32, %c0_i32_0 : i32, i32, i32
  }
}

</mosaic_0001>

<llo_original>
// kernel: tpu_custom_call.1
$region0: #{tpu_custom_call.1}
  #allocation0 [shape = 'u32[]', space=smem, size = 0x4, offset = 0x4, fixed_abs, tag = 'smem constant byte address 0x4 - core index']
  #allocation1 [shape = 'u32[72,128]{1,0:T(1,128)}', space=vmem, size = 0x9000, scoped, tag = 'internal scratch']
  #allocation2 [shape = 'f32[1,1]{1,0:T(1,128)S(1)}', space=vmem, size = 0x200, scoped, tag = 'scoped memory for tpu_custom_call.1']
  %s0 = inlined_call_operand.vmem [shape: f32[200,16], index: 0, kind: input, shape index: {}]
  %s1 = inlined_call_operand.vmem [shape: bf16[16,64], index: 1, kind: input, shape index: {}]
  %s2 = inlined_call_operand.vmem [shape: f32[1,64], index: 2, kind: input, shape index: {}]
  %s3 = inlined_call_operand.vmem [shape: bf16[64,64], index: 3, kind: input, shape index: {}]
  %s4 = inlined_call_operand.vmem [shape: f32[1,64], index: 4, kind: input, shape index: {}]
  %s5 = inlined_call_operand.vmem [shape: f32[1,64], index: 5, kind: input, shape index: {}]
  %s6 = inlined_call_operand.<no memory space> [shape: f32[1,1], index: 6, kind: input, shape index: {}]
  %s7 = inlined_call_operand.hbm [shape: f32[2,1,128], index: 7, kind: output, shape index: {}]
  %s8 = sld [smem:[#allocation0]]
  $region61: #{tpu_custom_call.1} parent=0
    _
  %s10 = ssub.s32 1, %s8
  %s11 = scalar_select 0, %s10, %s8
  %v12 = vstv %s6
  %13 = vst [vmem:[#allocation2] sm:$0x1] %v12
  $region1: #{tpu_custom_call.1} parent=0
    #allocation3 [shape = 'u8[1024]{0}', space=vmem, size = 0x400, scoped, tag = 'output window, operand 0']
    #allocation4 [shape = 's32[2]{0}', space=sflag, size = 0x8, scoped, tag = 'scoped memory for tpu_custom_call.1']
    %14 = vsyncpa [#allocation4], 0
    %s15 = scalar_lea.sflag [#allocation4], 1
    %16 = vsyncpa %s15, 0
    loop: start=0, step=1, limit=4
    $region2: #{tpu_custom_call.1} parent=1 // loop_pre_header
      _
    $region3: #{tpu_custom_call.1} parent=1 // loop_header
      %s18 = sphi 0, %s22
      %p19 = scmp.ge.s32.totalorder %s18, 4
      %s28 = sphi 0, %s30
      %s31 = sphi 0, %s28
      %s32 = sphi 0, %s31
      %s48 = sphi 0, %s32
      %s52 = sphi 0, %s52
      %s54 = sphi 0, %s52
      %s55 = sphi 0, %s54
      %s69 = sphi 0, %s55
      %s73 = sphi 0, %s73
      %s75 = sphi 0, %s73
      %s76 = sphi 0, %s75
      %s90 = sphi 0, %s76
      %s94 = sphi 0, %s94
      %s96 = sphi 0, %s94
      %s97 = sphi 0, %s96
      %s111 = sphi 0, %s97
      %s115 = sphi 0, %s115
      %s117 = sphi 0, %s115
      %s118 = sphi 0, %s117
      %s132 = sphi 0, %s118
      %s136 = sphi 0, %s136
      %s138 = sphi 0, %s136
      %s139 = sphi 0, %s138
      %s153 = sphi 0, %s139
      %s157 = sphi 0, %s157
      %s159 = sphi 0, %s157
      %s160 = sphi 0, %s159
      %s174 = sphi 0, %s160
      %s180 = sphi 0, %s182
      %s183 = sphi 0, %s180
      %s184 = sphi 0, %s183
      %s200 = sphi 0, %s184
    $region4: #{tpu_custom_call.1} parent=1 // loop_header_branch
      %21 = sbr.rel (%p19) target = $region8
    $region5: #{tpu_custom_call.1} parent=1 // loop_body
      %s23 = ssub.s32 %s18, 1
      %s24 = ssub.s32 %s18, 2
      %s25 = sadd.s32 %s18, 1
      %s26 = ssub.s32 %s18, %s25
      %p27 = scmp.eq.s32.totalorder %s26, 0
      %s29 = sadd.s32 %s28, 1
      %s30 = scalar_select %p27, %s28, %s29
      %p33 = pneg %p27
      %p34 = scmp.eq.s32.totalorder %s18, 1
      %p35 = por %p33, %p34
      %p36 = scmp.ne.s32.totalorder %s28, %s31
      %p37 = scmp.eq.s32.totalorder %s18, 0
      %p38 = por %p36, %p37
      %p39 = scmp.ne.s32.totalorder %s28, %s31
      %p40 = scmp.eq.s32.totalorder %s23, 1
      %p41 = por %p39, %p40
      %p42 = scmp.ne.s32.totalorder %s31, %s32
      %p43 = scmp.eq.s32.totalorder %s23, 0
      %p44 = por %p42, %p43
      %p45 = scmp.ne.s32.totalorder %s31, %s32
      %p46 = scmp.eq.s32.totalorder %s24, 1
      %p47 = por %p45, %p46
      %p49 = scmp.ne.s32.totalorder %s32, %s48
      %p50 = scmp.eq.s32.totalorder %s24, 0
      %p51 = por %p49, %p50
      %s53 = sadd.s32 %s52, 1
      %p56 = scmp.eq.s32.totalorder %s18, 1
      %p57 = scmp.ne.s32.totalorder %s52, %s54
      %p58 = scmp.eq.s32.totalorder %s18, 0
      %p59 = por %p57, %p58
      %p60 = scmp.ne.s32.totalorder %s52, %s54
      %p61 = scmp.eq.s32.totalorder %s23, 1
      %p62 = por %p60, %p61
      %p63 = scmp.ne.s32.totalorder %s54, %s55
      %p64 = scmp.eq.s32.totalorder %s23, 0
      %p65 = por %p63, %p64
      %p66 = scmp.ne.s32.totalorder %s54, %s55
      %p67 = scmp.eq.s32.totalorder %s24, 1
      %p68 = por %p66, %p67
      %p70 = scmp.ne.s32.totalorder %s55, %s69
      %p71 = scmp.eq.s32.totalorder %s24, 0
      %p72 = por %p70, %p71
      %s74 = sadd.s32 %s73, 1
      %p77 = scmp.eq.s32.totalorder %s18, 1
      %p78 = scmp.ne.s32.totalorder %s73, %s75
      %p79 = scmp.eq.s32.totalorder %s18, 0
      %p80 = por %p78, %p79
      %p81 = scmp.ne.s32.totalorder %s73, %s75
      %p82 = scmp.eq.s32.totalorder %s23, 1
      %p83 = por %p81, %p82
      %p84 = scmp.ne.s32.totalorder %s75, %s76
      %p85 = scmp.eq.s32.totalorder %s23, 0
      %p86 = por %p84, %p85
      %p87 = scmp.ne.s32.totalorder %s75, %s76
      %p88 = scmp.eq.s32.totalorder %s24, 1
      %p89 = por %p87, %p88
      %p91 = scmp.ne.s32.totalorder %s76, %s90
      %p92 = scmp.eq.s32.totalorder %s24, 0
      %p93 = por %p91, %p92
      %s95 = sadd.s32 %s94, 1
      %p98 = scmp.eq.s32.totalorder %s18, 1
      %p99 = scmp.ne.s32.totalorder %s94, %s96
      %p100 = scmp.eq.s32.totalorder %s18, 0
      %p101 = por %p99, %p100
      %p102 = scmp.ne.s32.totalorder %s94, %s96
      %p103 = scmp.eq.s32.totalorder %s23, 1
      %p104 = por %p102, %p103
      %p105 = scmp.ne.s32.totalorder %s96, %s97
      %p106 = scmp.eq.s32.totalorder %s23, 0
      %p107 = por %p105, %p106
      %p108 = scmp.ne.s32.totalorder %s96, %s97
      %p109 = scmp.eq.s32.totalorder %s24, 1
      %p110 = por %p108, %p109
      %p112 = scmp.ne.s32.totalorder %s97, %s111
      %p113 = scmp.eq.s32.totalorder %s24, 0
      %p114 = por %p112, %p113
      %s116 = sadd.s32 %s115, 1
      %p119 = scmp.eq.s32.totalorder %s18, 1
      %p120 = scmp.ne.s32.totalorder %s115, %s117
      %p121 = scmp.eq.s32.totalorder %s18, 0
      %p122 = por %p120, %p121
      %p123 = scmp.ne.s32.totalorder %s115, %s117
      %p124 = scmp.eq.s32.totalorder %s23, 1
      %p125 = por %p123, %p124
      %p126 = scmp.ne.s32.totalorder %s117, %s118
      %p127 = scmp.eq.s32.totalorder %s23, 0
      %p128 = por %p126, %p127
      %p129 = scmp.ne.s32.totalorder %s117, %s118
      %p130 = scmp.eq.s32.totalorder %s24, 1
      %p131 = por %p129, %p130
      %p133 = scmp.ne.s32.totalorder %s118, %s132
      %p134 = scmp.eq.s32.totalorder %s24, 0
      %p135 = por %p133, %p134
      %s137 = sadd.s32 %s136, 1
      %p140 = scmp.eq.s32.totalorder %s18, 1
      %p141 = scmp.ne.s32.totalorder %s136, %s138
      %p142 = scmp.eq.s32.totalorder %s18, 0
      %p143 = por %p141, %p142
      %p144 = scmp.ne.s32.totalorder %s136, %s138
      %p145 = scmp.eq.s32.totalorder %s23, 1
      %p146 = por %p144, %p145
      %p147 = scmp.ne.s32.totalorder %s138, %s139
      %p148 = scmp.eq.s32.totalorder %s23, 0
      %p149 = por %p147, %p148
      %p150 = scmp.ne.s32.totalorder %s138, %s139
      %p151 = scmp.eq.s32.totalorder %s24, 1
      %p152 = por %p150, %p151
      %p154 = scmp.ne.s32.totalorder %s139, %s153
      %p155 = scmp.eq.s32.totalorder %s24, 0
      %p156 = por %p154, %p155
      %s158 = sadd.s32 %s157, 1
      %p161 = scmp.eq.s32.totalorder %s18, 1
      %p162 = scmp.ne.s32.totalorder %s157, %s159
      %p163 = scmp.eq.s32.totalorder %s18, 0
      %p164 = por %p162, %p163
      %p165 = scmp.ne.s32.totalorder %s157, %s159
      %p166 = scmp.eq.s32.totalorder %s23, 1
      %p167 = por %p165, %p166
      %p168 = scmp.ne.s32.totalorder %s159, %s160
      %p169 = scmp.eq.s32.totalorder %s23, 0
      %p170 = por %p168, %p169
      %p171 = scmp.ne.s32.totalorder %s159, %s160
      %p172 = scmp.eq.s32.totalorder %s24, 1
      %p173 = por %p171, %p172
      %p175 = scmp.ne.s32.totalorder %s160, %s174
      %p176 = scmp.eq.s32.totalorder %s24, 0
      %p177 = por %p175, %p176
      %s178 = ssub.s32 %s18, %s25
      %p179 = scmp.eq.s32.totalorder %s178, 0
      %s181 = sadd.s32 %s180, 1
      %s182 = scalar_select %p179, %s180, %s181
      %p185 = pneg %p179
      %p186 = scmp.eq.s32.totalorder %s18, 1
      %p187 = por %p185, %p186
      %p188 = scmp.ne.s32.totalorder %s180, %s183
      %p189 = scmp.eq.s32.totalorder %s18, 0
      %p190 = por %p188, %p189
      %p191 = scmp.ne.s32.totalorder %s180, %s183
      %p192 = scmp.eq.s32.totalorder %s23, 1
      %p193 = por %p191, %p192
      %p194 = scmp.ne.s32.totalorder %s183, %s184
      %p195 = scmp.eq.s32.totalorder %s23, 0
      %p196 = por %p194, %p195
      %p197 = scmp.ne.s32.totalorder %s183, %s184
      %p198 = scmp.eq.s32.totalorder %s24, 1
      %p199 = por %p197, %p198
      %p201 = scmp.ne.s32.totalorder %s184, %s200
      %p202 = scmp.eq.s32.totalorder %s24, 0
      %p203 = por %p201, %p202
      %p204 = scmp.le.s32.totalorder 1, %s18
      %p205 = scmp.lt.s32.totalorder %s18, 3
      %p206 = pnand %p204, %p205
      %p207 = pneg %p206
      // Predicated region
      $region9: #{tpu_custom_call.1} parent=5 // pred_check
        _
      $region10: #{tpu_custom_call.1} parent=5 // pred_check_branch
        %209 = sbr.rel (%p206) target = $region12
      $region11: #{tpu_custom_call.1} parent=5 // pred_region
        %s210 = ssub.s32 %s18, 1
        // Predicated region
        $region13: #{tpu_custom_call.1} parent=11 // pred_check
          %p211 = pneg %p65
        $region14: #{tpu_custom_call.1} parent=11 // pred_check_branch
          %213 = sbr.rel (%p211) target = $region16
        $region15: #{tpu_custom_call.1} parent=11 // pred_region
          _
        $region16: #{tpu_custom_call.1} parent=11 // pred_fallthru
          _
        // Predicated region
        $region17: #{tpu_custom_call.1} parent=11 // pred_check
          %p214 = pneg %p86
        $region18: #{tpu_custom_call.1} parent=11 // pred_check_branch
          %216 = sbr.rel (%p214) target = $region20
        $region19: #{tpu_custom_call.1} parent=11 // pred_region
          _
        $region20: #{tpu_custom_call.1} parent=11 // pred_fallthru
          _
        // Predicated region
        $region21: #{tpu_custom_call.1} parent=11 // pred_check
          %p217 = pneg %p107
        $region22: #{tpu_custom_call.1} parent=11 // pred_check_branch
          %219 = sbr.rel (%p217) target = $region24
        $region23: #{tpu_custom_call.1} parent=11 // pred_region
          _
        $region24: #{tpu_custom_call.1} parent=11 // pred_fallthru
          _
        // Predicated region
        $region25: #{tpu_custom_call.1} parent=11 // pred_check
          %p220 = pneg %p128
        $region26: #{tpu_custom_call.1} parent=11 // pred_check_branch
          %222 = sbr.rel (%p220) target = $region28
        $region27: #{tpu_custom_call.1} parent=11 // pred_region
          _
        $region28: #{tpu_custom_call.1} parent=11 // pred_fallthru
          _
        // Predicated region
        $region29: #{tpu_custom_call.1} parent=11 // pred_check
          %p223 = pneg %p149
        $region30: #{tpu_custom_call.1} parent=11 // pred_check_branch
          %225 = sbr.rel (%p223) target = $region32
        $region31: #{tpu_custom_call.1} parent=11 // pred_region
          _
        $region32: #{tpu_custom_call.1} parent=11 // pred_fallthru
          _
        // Predicated region
        $region33: #{tpu_custom_call.1} parent=11 // pred_check
          %p226 = pneg %p170
        $region34: #{tpu_custom_call.1} parent=11 // pred_check_branch
          %228 = sbr.rel (%p226) target = $region36
        $region35: #{tpu_custom_call.1} parent=11 // pred_region
          _
        $region36: #{tpu_custom_call.1} parent=11 // pred_fallthru
          _
      $region12: #{tpu_custom_call.1} parent=5 // pred_fallthru
        _
      %p229 = scmp.lt.s32.totalorder %s18, 2
      // Predicated region
      $region37: #{tpu_custom_call.1} parent=5 // pred_check
        %p230 = pneg %p229
      $region38: #{tpu_custom_call.1} parent=5 // pred_check_branch
        %232 = sbr.rel (%p230) target = $region40
      $region39: #{tpu_custom_call.1} parent=5 // pred_region
        // Predicated region
        $region41: #{tpu_custom_call.1} parent=39 // pred_check
          %p233 = pneg %p38
        $region42: #{tpu_custom_call.1} parent=39 // pred_check_branch
          %235 = sbr.rel (%p233) target = $region44
        $region43: #{tpu_custom_call.1} parent=39 // pred_region
          %s236 = smul.u32 16, %s18
          %s237 = ssub.s32 25, %s236
          %p238 = scmp.lt.s32.totalorder %s237, 16
          %s239 = scalar_select %p238, %s237, 16
          %s240 = smul.u32 8, %s239
          %p241 = scmp.lt.s32.totalorder %s236, 24
          %s242 = scalar_select %p241, %s236, 24
          %s243 = smul.addr %s242, 8
          %s244 = scalar_lea.vmem %s0, %s243
          %s245 = smul.u32 16, %s18
          %s246 = ssub.s32 25, %s245
          %p247 = scmp.lt.s32.totalorder %s246, 16
          %s248 = scalar_select %p247, %s246, 16
          %s249 = smul.u32 8, %s248
        $region44: #{tpu_custom_call.1} parent=39 // pred_fallthru
          _
      $region40: #{tpu_custom_call.1} parent=5 // pred_fallthru
        _
      %p250 = scmp.le.s32.totalorder 1, %s18
      %p251 = scmp.lt.s32.totalorder %s18, 3
      %p252 = pnand %p250, %p251
      %p253 = pneg %p252
      // Predicated region
      $region45: #{tpu_custom_call.1} parent=5 // pred_check
        _
      $region46: #{tpu_custom_call.1} parent=5 // pred_check_branch
        %255 = sbr.rel (%p252) target = $region48
      $region47: #{tpu_custom_call.1} parent=5 // pred_region
        %s256 = ssub.s32 %s18, 1
        %s257 = smul.u32 16, %s23
        %s258 = ssub.s32 25, %s257
        %p259 = scmp.lt.s32.totalorder %s258, 16
        %s260 = scalar_select %p259, %s258, 16
        %s261 = smul.u32 8, %s260
        %p262 = scmp.lt.s32.totalorder %s257, 24
        %s263 = scalar_select %p262, %s257, 24
        %s264 = smul.addr %s263, 8
        %s265 = scalar_lea.vmem %s0, %s264
        %p266 = pneg %p44
        %p267 = pneg %p41
        %p268 = pneg %p65
        %p269 = pneg %p62
        %p270 = pneg %p86
        %p271 = pneg %p83
        %p272 = pneg %p107
        %p273 = pneg %p104
        %p274 = pneg %p128
        %p275 = pneg %p125
        %p276 = pneg %p149
        %p277 = pneg %p146
        %p278 = pneg %p170
        %p279 = pneg %p167
        %p280 = pneg %p196
        %p281 = pneg %p193
        %s282 = sand.u32 %s183, 1
        %s283 = scalar_lea.sflag [#allocation4], %s282
        %s284 = sand.u32 %s183, 1
        %s285 = scalar_lea.vmem [#allocation3], %s284
        %s286 = smul.u32 16, %s23
        %s287 = ssub.s32 25, %s286
        %p288 = scmp.lt.s32.totalorder %s287, 16
        %s289 = scalar_select %p288, %s287, 16
        %s290 = smul.u32 8, %s289
        %p291 = scmp.lt.s32.totalorder %s286, 24
        %s292 = scalar_select %p291, %s286, 24
        %s293 = smul.addr %s292, 8
        %s294 = scalar_lea.vmem %s0, %s293
        %s295 = smul.u32 16, %s23
        %s296 = ssub.s32 25, %s295
        %p297 = scmp.lt.s32.totalorder %s296, 16
        %s298 = scalar_select %p297, %s296, 16
        %s299 = smul.u32 8, %s298
        %v301 = vld [vmem:[%s294] sm:$0xff]
        %v302 = vld [vmem:[%s294 + $0x8] sm:$0xff]
        %v303 = vld [vmem:[%s294 + $0x10] sm:$0xff]
        %v304 = vld [vmem:[%s294 + $0x18] sm:$0xff]
        %v305 = vld [vmem:[%s294 + $0x20] sm:$0xff]
        %v306 = vld [vmem:[%s294 + $0x28] sm:$0xff]
        %v307 = vld [vmem:[%s294 + $0x30] sm:$0xff]
        %v308 = vld [vmem:[%s294 + $0x38] sm:$0xff]
        %v309 = vld [vmem:[%s294 + $0x40] sm:$0xff]
        %v310 = vld [vmem:[%s294 + $0x48] sm:$0xff]
        %v311 = vld [vmem:[%s294 + $0x50] sm:$0xff]
        %v312 = vld [vmem:[%s294 + $0x58] sm:$0xff]
        %v313 = vld [vmem:[%s294 + $0x60] sm:$0xff]
        %v314 = vld [vmem:[%s294 + $0x68] sm:$0xff]
        %v315 = vld [vmem:[%s294 + $0x70] sm:$0xff]
        %v316 = vld [vmem:[%s294 + $0x78] sm:$0xff]
        %v317 = vpack.c.bf16 %v302, %v301
        %v318 = vpack.c.bf16 %v304, %v303
        %v319 = vpack.c.bf16 %v306, %v305
        %v320 = vpack.c.bf16 %v308, %v307
        %v321 = vpack.c.bf16 %v310, %v309
        %v322 = vpack.c.bf16 %v312, %v311
        %v323 = vpack.c.bf16 %v314, %v313
        %v324 = vpack.c.bf16 %v316, %v315
        %v325 = vld [vmem:[%s1] sm:$0xf]
        %v326 = vld [vmem:[%s1 + $0x4] sm:$0xf]
        %v327 = vld [vmem:[%s2] sm:$0x1]
        %v329 = vperm.slane %v327, 0
        %v333 = vunpack.c.l.b16 %v325
        %v334 = vunpack.c.l.b16 %v326
        %v335 = vpack.c.b16 %v334, %v333
        %vm337 = vcmask 130048
        %v339 = vsel %vm337, %v317, 0
        %v342 = vsel %vm337, %v318, 0
        %v345 = vsel %vm337, %v319, 0
        %v348 = vsel %vm337, %v320, 0
        %v351 = vsel %vm337, %v321, 0
        %v354 = vsel %vm337, %v322, 0
        %v357 = vsel %vm337, %v323, 0
        %v360 = vsel %vm337, %v324, 0
        %362 = vmatpush.bf16.msra.mxu0 0
        %363 = vmatpush.bf16.msra.mxu0 0
        %364 = vmatpush.bf16.msra.mxu0 0
        %365 = vmatpush.bf16.msra.mxu0 0
        %366 = vmatpush.bf16.msra.mxu0 0
        %367 = vmatpush.bf16.msra.mxu0 0
        %368 = vmatpush.bf16.msra.mxu0 0
        %369 = vmatpush.bf16.msra.mxu0 %v335
        %370 = vmatmul.bf16.gmra.mxu0 %v339
        %v371 = vpop.f32.mrf.mxu0
        %v372 = vadd.f32 %v329, %v371
        %v373 = vpop.f32.mrf.mxu0
        %v374 = vadd.f32 %v329, %v373
        %375 = vmatmul.bf16.gmra.mxu0 %v342
        %v376 = vpop.f32.mrf.mxu0
        %v377 = vadd.f32 %v329, %v376
        %v378 = vpop.f32.mrf.mxu0
        %v379 = vadd.f32 %v329, %v378
        %380 = vmatmul.bf16.gmra.mxu0 %v345
        %v381 = vpop.f32.mrf.mxu0
        %v382 = vadd.f32 %v329, %v381
        %v383 = vpop.f32.mrf.mxu0
        %v384 = vadd.f32 %v329, %v383
        %385 = vmatmul.bf16.gmra.mxu0 %v348
        %v386 = vpop.f32.mrf.mxu0
        %v387 = vadd.f32 %v329, %v386
        %v388 = vpop.f32.mrf.mxu0
        %v389 = vadd.f32 %v329, %v388
        %390 = vmatmul.bf16.gmra.mxu0 %v351
        %v391 = vpop.f32.mrf.mxu0
        %v392 = vadd.f32 %v329, %v391
        %v393 = vpop.f32.mrf.mxu0
        %v394 = vadd.f32 %v329, %v393
        %395 = vmatmul.bf16.gmra.mxu0 %v354
        %v396 = vpop.f32.mrf.mxu0
        %v397 = vadd.f32 %v329, %v396
        %v398 = vpop.f32.mrf.mxu0
        %v399 = vadd.f32 %v329, %v398
        %400 = vmatmul.bf16.gmra.mxu0 %v357
        %v401 = vpop.f32.mrf.mxu0
        %v402 = vadd.f32 %v329, %v401
        %v403 = vpop.f32.mrf.mxu0
        %v404 = vadd.f32 %v329, %v403
        %405 = vmatmul.bf16.gmra.mxu0 %v360
        %v406 = vpop.f32.mrf.mxu0
        %v407 = vadd.f32 %v329, %v406
        %v408 = vpop.f32.mrf.mxu0
        %v409 = vadd.f32 %v329, %v408
        %410 = vdwg.mxu0
        %v411 = vmax.f32 %v372, 0.0
        %v412 = vmax.f32 %v374, 0.0
        %v413 = vmax.f32 %v377, 0.0
        %v414 = vmax.f32 %v379, 0.0
        %v415 = vmax.f32 %v382, 0.0
        %v416 = vmax.f32 %v384, 0.0
        %v417 = vmax.f32 %v387, 0.0
        %v418 = vmax.f32 %v389, 0.0
        %v419 = vmax.f32 %v392, 0.0
        %v420 = vmax.f32 %v394, 0.0
        %v421 = vmax.f32 %v397, 0.0
        %v422 = vmax.f32 %v399, 0.0
        %v423 = vmax.f32 %v402, 0.0
        %v424 = vmax.f32 %v404, 0.0
        %v425 = vmax.f32 %v407, 0.0
        %v426 = vmax.f32 %v409, 0.0
        %v427 = vpack.c.bf16 %v412, %v411
        %v428 = vpack.c.bf16 %v414, %v413
        %v429 = vpack.c.bf16 %v416, %v415
        %v430 = vpack.c.bf16 %v418, %v417
        %v431 = vpack.c.bf16 %v420, %v419
        %v432 = vpack.c.bf16 %v422, %v421
        %v433 = vpack.c.bf16 %v424, %v423
        %v434 = vpack.c.bf16 %v426, %v425
        %v435 = vld [vmem:[%s3] sm:$0xf]
        %v436 = vld [vmem:[%s3 + $0x4] sm:$0xf]
        %v437 = vld [vmem:[%s3 + $0x8] sm:$0xf]
        %v438 = vld [vmem:[%s3 + $0xc] sm:$0xf]
        %v439 = vld [vmem:[%s3 + $0x10] sm:$0xf]
        %v440 = vld [vmem:[%s3 + $0x14] sm:$0xf]
        %v441 = vld [vmem:[%s3 + $0x18] sm:$0xf]
        %v442 = vld [vmem:[%s3 + $0x1c] sm:$0xf]
        %v443 = vld [vmem:[%s4] sm:$0x1]
        %v445 = vperm.slane %v443, 0
        %v455 = vunpack.c.l.b16 %v435
        %v456 = vunpack.c.l.b16 %v436
        %v457 = vunpack.c.l.b16 %v437
        %v458 = vunpack.c.l.b16 %v438
        %v459 = vunpack.c.l.b16 %v439
        %v460 = vunpack.c.l.b16 %v440
        %v461 = vunpack.c.l.b16 %v441
        %v462 = vunpack.c.l.b16 %v442
        %v463 = vpack.c.b16 %v456, %v455
        %v464 = vpack.c.b16 %v458, %v457
        %v465 = vpack.c.b16 %v460, %v459
        %v466 = vpack.c.b16 %v462, %v461
        %vm471 = vcmask 523264
        %v473 = vsel %vm471, %v427, 0
        %v476 = vsel %vm471, %v428, 0
        %v479 = vsel %vm471, %v429, 0
        %v482 = vsel %vm471, %v430, 0
        %v485 = vsel %vm471, %v431, 0
        %v488 = vsel %vm471, %v432, 0
        %v491 = vsel %vm471, %v433, 0
        %v494 = vsel %vm471, %v434, 0
        %496 = vmatpush.bf16.msra.mxu0 0
        %497 = vmatpush.bf16.msra.mxu0 0
        %498 = vmatpush.bf16.msra.mxu0 0
        %499 = vmatpush.bf16.msra.mxu0 0
        %500 = vmatpush.bf16.msra.mxu0 %v466
        %501 = vmatpush.bf16.msra.mxu0 %v465
        %502 = vmatpush.bf16.msra.mxu0 %v464
        %503 = vmatpush.bf16.msra.mxu0 %v463
        %504 = vmatmul.bf16.gmra.mxu0 %v473
        %v505 = vpop.f32.mrf.mxu0
        %v506 = vadd.f32 %v445, %v505
        %v507 = vpop.f32.mrf.mxu0
        %v508 = vadd.f32 %v445, %v507
        %509 = vmatmul.bf16.gmra.mxu0 %v476
        %v510 = vpop.f32.mrf.mxu0
        %v511 = vadd.f32 %v445, %v510
        %v512 = vpop.f32.mrf.mxu0
        %v513 = vadd.f32 %v445, %v512
        %514 = vmatmul.bf16.gmra.mxu0 %v479
        %v515 = vpop.f32.mrf.mxu0
        %v516 = vadd.f32 %v445, %v515
        %v517 = vpop.f32.mrf.mxu0
        %v518 = vadd.f32 %v445, %v517
        %519 = vmatmul.bf16.gmra.mxu0 %v482
        %v520 = vpop.f32.mrf.mxu0
        %v521 = vadd.f32 %v445, %v520
        %v522 = vpop.f32.mrf.mxu0
        %v523 = vadd.f32 %v445, %v522
        %524 = vmatmul.bf16.gmra.mxu0 %v485
        %v525 = vpop.f32.mrf.mxu0
        %v526 = vadd.f32 %v445, %v525
        %v527 = vpop.f32.mrf.mxu0
        %v528 = vadd.f32 %v445, %v527
        %529 = vmatmul.bf16.gmra.mxu0 %v488
        %v530 = vpop.f32.mrf.mxu0
        %v531 = vadd.f32 %v445, %v530
        %v532 = vpop.f32.mrf.mxu0
        %v533 = vadd.f32 %v445, %v532
        %534 = vmatmul.bf16.gmra.mxu0 %v491
        %v535 = vpop.f32.mrf.mxu0
        %v536 = vadd.f32 %v445, %v535
        %v537 = vpop.f32.mrf.mxu0
        %v538 = vadd.f32 %v445, %v537
        %539 = vmatmul.bf16.gmra.mxu0 %v494
        %v540 = vpop.f32.mrf.mxu0
        %v541 = vadd.f32 %v445, %v540
        %v542 = vpop.f32.mrf.mxu0
        %v543 = vadd.f32 %v445, %v542
        %544 = vdwg.mxu0
        %v545 = vmax.f32 %v506, 0.0
        %v546 = vmax.f32 %v508, 0.0
        %v547 = vmax.f32 %v511, 0.0
        %v548 = vmax.f32 %v513, 0.0
        %v549 = vmax.f32 %v516, 0.0
        %v550 = vmax.f32 %v518, 0.0
        %v551 = vmax.f32 %v521, 0.0
        %v552 = vmax.f32 %v523, 0.0
        %v553 = vmax.f32 %v526, 0.0
        %v554 = vmax.f32 %v528, 0.0
        %v555 = vmax.f32 %v531, 0.0
        %v556 = vmax.f32 %v533, 0.0
        %v557 = vmax.f32 %v536, 0.0
        %v558 = vmax.f32 %v538, 0.0
        %v559 = vmax.f32 %v541, 0.0
        %v560 = vmax.f32 %v543, 0.0
        %v561 = vld [vmem:[%s5] sm:$0x1]
        %v563 = vperm.slane %v561, 0
        %v565 = vmul.f32 %v545, %v563
        %v566 = vmul.f32 %v546, %v563
        %v567 = vmul.f32 %v547, %v563
        %v568 = vmul.f32 %v548, %v563
        %v569 = vmul.f32 %v549, %v563
        %v570 = vmul.f32 %v550, %v563
        %v571 = vmul.f32 %v551, %v563
        %v572 = vmul.f32 %v552, %v563
        %v573 = vmul.f32 %v553, %v563
        %v574 = vmul.f32 %v554, %v563
        %v575 = vmul.f32 %v555, %v563
        %v576 = vmul.f32 %v556, %v563
        %v577 = vmul.f32 %v557, %v563
        %v578 = vmul.f32 %v558, %v563
        %v579 = vmul.f32 %v559, %v563
        %v580 = vmul.f32 %v560, %v563
        %v581 = vsel %vm471, %v565, 0.0
        %582 = vadd.xlane.f32.xlu0 %v581
        %v583 = vpop.xlane.xlu0 %582
        %v584 = vsel %vm471, %v566, 0.0
        %585 = vadd.xlane.f32.xlu0 %v584
        %v586 = vpop.xlane.xlu0 %585
        %v587 = vsel %vm471, %v567, 0.0
        %588 = vadd.xlane.f32.xlu0 %v587
        %v589 = vpop.xlane.xlu0 %588
        %v590 = vsel %vm471, %v568, 0.0
        %591 = vadd.xlane.f32.xlu0 %v590
        %v592 = vpop.xlane.xlu0 %591
        %v593 = vsel %vm471, %v569, 0.0
        %594 = vadd.xlane.f32.xlu0 %v593
        %v595 = vpop.xlane.xlu0 %594
        %v596 = vsel %vm471, %v570, 0.0
        %597 = vadd.xlane.f32.xlu0 %v596
        %v598 = vpop.xlane.xlu0 %597
        %v599 = vsel %vm471, %v571, 0.0
        %600 = vadd.xlane.f32.xlu0 %v599
        %v601 = vpop.xlane.xlu0 %600
        %v602 = vsel %vm471, %v572, 0.0
        %603 = vadd.xlane.f32.xlu0 %v602
        %v604 = vpop.xlane.xlu0 %603
        %v605 = vsel %vm471, %v573, 0.0
        %606 = vadd.xlane.f32.xlu0 %v605
        %v607 = vpop.xlane.xlu0 %606
        %v608 = vsel %vm471, %v574, 0.0
        %609 = vadd.xlane.f32.xlu0 %v608
        %v610 = vpop.xlane.xlu0 %609
        %v611 = vsel %vm471, %v575, 0.0
        %612 = vadd.xlane.f32.xlu0 %v611
        %v613 = vpop.xlane.xlu0 %612
        %v614 = vsel %vm471, %v576, 0.0
        %615 = vadd.xlane.f32.xlu0 %v614
        %v616 = vpop.xlane.xlu0 %615
        %v617 = vsel %vm471, %v577, 0.0
        %618 = vadd.xlane.f32.xlu0 %v617
        %v619 = vpop.xlane.xlu0 %618
        %v620 = vsel %vm471, %v578, 0.0
        %621 = vadd.xlane.f32.xlu0 %v620
        %v622 = vpop.xlane.xlu0 %621
        %v623 = vsel %vm471, %v579, 0.0
        %624 = vadd.xlane.f32.xlu0 %v623
        %v625 = vpop.xlane.xlu0 %624
        %v626 = vsel %vm471, %v580, 0.0
        %627 = vadd.xlane.f32.xlu0 %v626
        %v628 = vpop.xlane.xlu0 %627
        %629 = vxpose.xlu0.b32.start [1/16] %v583, 128
        %630 = vxpose.xlu0.b32.cont [2/16] %v586, 128
        %631 = vxpose.xlu0.b32.cont [3/16] %v589, 128
        %632 = vxpose.xlu0.b32.cont [4/16] %v592, 128
        %633 = vxpose.xlu0.b32.cont [5/16] %v595, 128
        %634 = vxpose.xlu0.b32.cont [6/16] %v598, 128
        %635 = vxpose.xlu0.b32.cont [7/16] %v601, 128
        %636 = vxpose.xlu0.b32.cont [8/16] %v604, 128
        %637 = vxpose.xlu0.b32.cont [9/16] %v607, 128
        %638 = vxpose.xlu0.b32.cont [10/16] %v610, 128
        %639 = vxpose.xlu0.b32.cont [11/16] %v613, 128
        %640 = vxpose.xlu0.b32.cont [12/16] %v616, 128
        %641 = vxpose.xlu0.b32.cont [13/16] %v619, 128
        %642 = vxpose.xlu0.b32.cont [14/16] %v622, 128
        %643 = vxpose.xlu0.b32.cont [15/16] %v625, 128
        %644 = vxpose.xlu0.b32.end [16/16] %v628, 128
        %v645 = vpop.trf.xlu0
        %v646 = vpop.trf.xlu0
        %v647 = vpop.trf.xlu0
        %v648 = vpop.trf.xlu0
        %v649 = vpop.trf.xlu0
        %v650 = vpop.trf.xlu0
        %v651 = vpop.trf.xlu0
        %v652 = vpop.trf.xlu0
        %v653 = vpop.trf.xlu0
        %v654 = vpop.trf.xlu0
        %v655 = vpop.trf.xlu0
        %v656 = vpop.trf.xlu0
        %v657 = vpop.trf.xlu0
        %v658 = vpop.trf.xlu0
        %v659 = vpop.trf.xlu0
        %v660 = vpop.trf.xlu0
        %v661 = vld [vmem:[#allocation2] sm:$0x1]
        %663 = vset.pattern.permute.xlu0 0
        %664 = vperm.xlu0 %663, %v661
        %v665 = vpop.permute.xlu0 %664
        %v667 = vperm.slane %v665, 0
        %v668 = vadd.f32 %v645, %v667
        %v669 = vsub.f32 0.0, %v668
        %v670 = vmul.f32 %v669, 1.442695
        %v671 = vpow.pop %v670
        %v672 = vadd.f32 %v671, 1.0
        %v673 = vrcp.pop %v672
        %674 = vst [vmem:[%s285] sm:$0x1] %v673
        %s675 = sand.u32 %s183, 1
        %s676 = scalar_lea.sflag [#allocation4], %s675
        %s677 = sand.u32 %s183, 1
        %s678 = scalar_lea.vmem [#allocation3], %s677
        // Predicated region
        $region49: #{tpu_custom_call.1} parent=47 // pred_check
          %p679 = pneg %p193
        $region50: #{tpu_custom_call.1} parent=47 // pred_check_branch
          %681 = sbr.rel (%p679) target = $region52
        $region51: #{tpu_custom_call.1} parent=47 // pred_region
          %683 = vsyncadd %s676, 0
          %s684 = scalar_lea.hbm %s7, %s23
          %s686 = sshll.u32 %s678, 4
          %s687 = int_to_ptr.vmem [resolvable:$true] %s686
          %s688 = sshll.u32 %s684, 4
          %s689 = int_to_ptr.hbm [resolvable:$true] %s688
          %691 = dma.vmem_to_hbm [thread:$0]  %s687, 16, %s689, %s676
        $region52: #{tpu_custom_call.1} parent=47 // pred_fallthru
          _
      $region48: #{tpu_custom_call.1} parent=5 // pred_fallthru
        _
      %p692 = scmp.le.s32.totalorder 2, %s18
      // Predicated region
      $region53: #{tpu_custom_call.1} parent=5 // pred_check
        %p693 = pneg %p692
      $region54: #{tpu_custom_call.1} parent=5 // pred_check_branch
        %695 = sbr.rel (%p693) target = $region56
      $region55: #{tpu_custom_call.1} parent=5 // pred_region
        %s696 = ssub.s32 %s18, 2
        // Predicated region
        $region57: #{tpu_custom_call.1} parent=55 // pred_check
          %p697 = pneg %p199
        $region58: #{tpu_custom_call.1} parent=55 // pred_check_branch
          %699 = sbr.rel (%p697) target = $region60
        $region59: #{tpu_custom_call.1} parent=55 // pred_region
          %s700 = sand.u32 %s184, 1
          %s701 = scalar_lea.sflag [#allocation4], %s700
          %s702 = sand.u32 %s184, 1
          %s703 = scalar_lea.vmem [#allocation3], %s702
          %705 = dma.done %s701, 16
        $region60: #{tpu_custom_call.1} parent=55 // pred_fallthru
          _
      $region56: #{tpu_custom_call.1} parent=5 // pred_fallthru
        _
    $region6: #{tpu_custom_call.1} parent=1 // loop_footer
      %s22 = sadd.s32 1, %s18
    $region7: #{tpu_custom_call.1} parent=1 // loop_footer_branch
      %17 = sbr.rel target = $region3
    $region8: #{tpu_custom_call.1} parent=1 // loop_exit
      _
    %706 = vsyncpa [#allocation4], 1
    %s707 = scalar_lea.sflag [#allocation4], 1
    %708 = vsyncpa %s707, 1

</llo_original>
